<compile_context>
chip_gen: v7x
topology: tpu7x:2x2x1
jax: 0.10.0
libtpu: 0.0.40
codegen_flags: <defaults>
</compile_context>

<pallas_src>
import jax
import jax.numpy as jnp
import numpy as np
from jax.experimental import pallas as pl
from jax.experimental.pallas import tpu as pltpu

# ---------------- synthetic model_params / metadata -------------------------
HIDDEN = 32                     # model_params['hidden_channels'] (== input dim, needed for skipsum)
NUM_LAYERS = 2                  # model_params['msg_passing_layers']
NEG_SLOPE = 0.01                # torch.nn.LeakyReLU() default
L2_NORM = True                  # model_params['L2_norm']
SKIP_SUM = True                 # model_params['layer_connectivity'] == 'skipsum'
HAS_JK = True                   # model_params['jumping_knowledge']
# pre_process_layers = post_process_layers = 1 -> every layer gets post_conv
# (LeakyReLU; batch_norm=False, dropout=0) and skipsum.
NODE_TYPES = ('user', 'item')
N_NODES = {'user': 16, 'item': 24}
N_USER = N_NODES['user']
N_ALL = N_NODES['user'] + N_NODES['item']          # 40 (multiple of 8)
W_ROWS = 3 * HIDDEN + 8                             # 96 weight rows + 1 bias row + 7 pad


# ---------------------------- Pallas kernel ---------------------------------
def _full_spec(shape):
    nd = len(shape)
    return pl.BlockSpec(shape, lambda i, _nd=nd: (0,) * _nd)


def _fused_forward_kernel(a_ref, x_ref, w_ref, out_ref):
    """Whole hetero message-passing forward (all layers + JK max) in one kernel.

    a_ref   : (N, N)          row-normalized hetero adjacency
                              [[A(u->user) | A(i->user)], [A(u->item) | A(i->item)]]
    x_ref   : (N, H)          stacked features, user rows [0,N_USER), item rows after
    w_ref   : (L, 104, 2H)    per layer, rows 0..3H-1 =
                              [[Wl(u->user)^T | Wl(u->item)^T],
                               [Wl(i->user)^T | Wl(i->item)^T],
                               [Wr_sum_user^T | Wr_sum_item^T]],
                              row 3H = per-dst summed biases, rows 3H+1.. = 0 pad
    out_ref : (N, H)          stacked JK-max output
    """
    f32 = jnp.float32
    H = HIDDEN
    a = a_ref[...]
    x = x_ref[...]

    # node-type row masks (user rows first) -- hoisted out of the layer loop.
    row_ids = jax.lax.broadcasted_iota(jnp.int32, (N_ALL, 1), 0)
    is_user = row_ids < N_USER
    mask_u = is_user.astype(f32)
    mask_i = 1.0 - mask_u

    jk = None
    for l in range(NUM_LAYERS):                     # static unroll (2 layers)
        # TODO(synk): switch to lax.fori_loop(unroll=True) carrying
        # (x, jk) if NUM_LAYERS grows beyond ~4 (vreg live-range guard).
        w = w_ref[l, 0:3 * H, :]                    # (3H, 2H)
        b = w_ref[l, 3 * H:3 * H + 1, :]            # (1, 2H)  [b_user | b_item]

        # block-diagonal source features: user-src rows fill lanes [0,H),
        # item-src rows fill lanes [H,2H).  One matmul then performs the mean
        # micro-aggregation for both edge types into both dst types at once.
        x_blk = jnp.concatenate([x * mask_u, x * mask_i], axis=-1)    # (N, 2H)
        agg = jnp.dot(a, x_blk, preferred_element_type=f32)           # (N, 2H)

        # aggregate-first fat matmul: [agg | x] @ W_stack (+ bias), lanes
        # [0,H) hold the dst=user result, [H,2H) the dst=item result.
        lhs = jnp.concatenate([agg, x], axis=-1)                      # (N, 3H)
        big = jnp.dot(lhs, w, preferred_element_type=f32) + b         # (N, 2H)
        pre = jnp.where(is_user, big[:, 0:H], big[:, H:2 * H])        # (N, H)

        # post_conv: LeakyReLU (batch_norm=False, dropout=0)
        out = jnp.where(pre >= 0, pre, NEG_SLOPE * pre)
        if SKIP_SUM:
            out = out + x
        if L2_NORM:
            # x / max(||x||, 1e-12) == x * rsqrt(max(||x||^2, 1e-24)); rsqrt on EUP.
            out = out * jax.lax.rsqrt(
                jnp.maximum(jnp.sum(out * out, axis=-1, keepdims=True), 1e-24))

        x = out
        if HAS_JK:
            jk = out if jk is None else jnp.maximum(jk, out)

    out_ref[...] = jk if HAS_JK else x              # single full-width store


def fused_forward(a_all, x_all, w_packed):
    n, h = x_all.shape
    args = (a_all, x_all, w_packed)
    slab = pl.pallas_call(
        _fused_forward_kernel,
        grid=(1,),
        in_specs=[_full_spec(v.shape) for v in args],
        out_specs=_full_spec((n, h)),
        out_shape=jax.ShapeDtypeStruct((n, h), jnp.float32),
        compiler_params=pltpu.CompilerParams(dimension_semantics=("arbitrary",)),
        # TODO(synk): at real graph sizes, tile dst rows ("parallel", uses both
        # v7x TCs) with the adjacency-column axis innermost ("arbitrary" + VMEM
        # f32 accumulator), cast adjacency/activation MXU operands to bf16
        # (keep epilogue f32 for v5e VPU/EUP), and budget tiles for 64 MiB VMEM
        # on v7x via vmem_limit_bytes.
    )(*args)
    return {'user': slab[:N_USER, :], 'item': slab[N_USER:, :]}


# ------------------------------ model glue -----------------------------------
def init_params(key):
    """One SAGEConv (W_l, W_r, b) per (layer, edge_type)."""
    params = []
    scale = 1.0 / np.sqrt(HIDDEN)
    for _ in range(NUM_LAYERS):
        layer_p = {}
        for dst in NODE_TYPES:
            for src in NODE_TYPES:
                key, k1, k2, k3 = jax.random.split(key, 4)
                layer_p[(src, dst)] = dict(
                    w_l=jax.random.uniform(k1, (HIDDEN, HIDDEN), jnp.float32, -scale, scale),
                    w_r=jax.random.uniform(k2, (HIDDEN, HIDDEN), jnp.float32, -scale, scale),
                    b=jax.random.uniform(k3, (1, HIDDEN), jnp.float32, -scale, scale),
                )
        params.append(layer_p)
    return params


def pack_params(params):
    """Pre-transpose / pre-sum / pre-stack weights + biases into ONE slab.

    Summing the lin_r weights/biases across incoming edge types and the
    skipsum path both require hidden_channels == input feature dim and
    macro_aggregation == 'sum' (asserted / assumed here).
    """
    layers = []
    for lp in params:
        for p in lp.values():
            assert p['w_l'].shape == (HIDDEN, HIDDEN), "skipsum/lin_r fold needs hidden == in_dim"
            assert p['w_r'].shape == (HIDDEN, HIDDEN)
        wl_uu = lp[('user', 'user')]['w_l']
        wl_iu = lp[('item', 'user')]['w_l']
        wl_ui = lp[('user', 'item')]['w_l']
        wl_ii = lp[('item', 'item')]['w_l']
        wr_user = lp[('user', 'user')]['w_r'] + lp[('item', 'user')]['w_r']   # dst=user
        wr_item = lp[('user', 'item')]['w_r'] + lp[('item', 'item')]['w_r']   # dst=item
        w_dst_user = jnp.concatenate([wl_uu.T, wl_iu.T, wr_user.T], axis=0)   # (3H, H)
        w_dst_item = jnp.concatenate([wl_ui.T, wl_ii.T, wr_item.T], axis=0)   # (3H, H)
        w_big = jnp.concatenate([w_dst_user, w_dst_item], axis=1)             # (3H, 2H)
        b_user = lp[('user', 'user')]['b'] + lp[('item', 'user')]['b']        # (1, H)
        b_item = lp[('user', 'item')]['b'] + lp[('item', 'item')]['b']
        b_row = jnp.concatenate([b_user, b_item], axis=1)                      # (1, 2H)
        pad = jnp.zeros((W_ROWS - 3 * HIDDEN - 1, 2 * HIDDEN), jnp.float32)
        layers.append(jnp.concatenate([w_big, b_row, pad], axis=0))            # (104, 2H)
    return jnp.stack(layers)                                                   # (L, 104, 2H)


def build_adjs(key):
    """Dense row-normalized adjacency (mean aggregation) per (src, dst)."""
    adjs = {}
    for dst in NODE_TYPES:
        for src in NODE_TYPES:
            key, k = jax.random.split(key)
            a = jax.random.bernoulli(k, 0.3, (N_NODES[dst], N_NODES[src])).astype(jnp.float32)
            deg = jnp.maximum(jnp.sum(a, axis=-1, keepdims=True), 1.0)
            adjs[(src, dst)] = a / deg
    return adjs


def pack_adjs(adjs):
    """One stacked hetero adjacency: dst rows [user;item], src cols [user|item]."""
    top = jnp.concatenate([adjs[('user', 'user')], adjs[('item', 'user')]], axis=1)  # (N_u, N)
    bot = jnp.concatenate([adjs[('user', 'item')], adjs[('item', 'item')]], axis=1)  # (N_i, N)
    return jnp.concatenate([top, bot], axis=0)                                        # (N, N)
    # TODO(synk): for production graphs replace the dense O(N^2) adjacency with a
    # sparse gather formulation (scalar-prefetch neighbor/offset tables).


def pack_x(x):
    return jnp.concatenate([x['user'], x['item']], axis=0)        # (N, H)


def forward(x, a_all, w_packed):
    return fused_forward(a_all, pack_x(x), w_packed)


# -------------------------- pure-JAX reference -------------------------------
def _layer_ref(a_u, a_i, x_u, x_i, x_dst, pu, pi):
    out = ((a_u @ x_u) @ pu['w_l'].T + x_dst @ pu['w_r'].T + pu['b']
           + (a_i @ x_i) @ pi['w_l'].T + x_dst @ pi['w_r'].T + pi['b'])
    out = jnp.where(out >= 0, out, NEG_SLOPE * out)
    out = out + x_dst
    nrm = jnp.sqrt(jnp.sum(out * out, axis=-1, keepdims=True))
    return out / jnp.maximum(nrm, 1e-12)


def forward_ref(x, adjs, params):
    xs = {nt: [] for nt in NODE_TYPES}
    for li in range(NUM_LAYERS):
        new_x = {}
        for dst in NODE_TYPES:
            new_x[dst] = _layer_ref(
                adjs[('user', dst)], adjs[('item', dst)],
                x['user'], x['item'], x[dst],
                params[li][('user', dst)], params[li][('item', dst)])
        x = new_x
        for nt in NODE_TYPES:
            xs[nt].append(x[nt])
    return {nt: jnp.max(jnp.stack(xs[nt], axis=0), axis=0) for nt in NODE_TYPES}


# --------------------------------- main --------------------------------------
if __name__ == "__main__":
    key = jax.random.PRNGKey(0)
    kx_u, kx_i, kp, ka = jax.random.split(key, 4)

    x = {
        'user': jax.random.normal(kx_u, (N_NODES['user'], HIDDEN), jnp.float32),
        'item': jax.random.normal(kx_i, (N_NODES['item'], HIDDEN), jnp.float32),
    }
    params = init_params(kp)
    adjs = build_adjs(ka)
    # TODO(synk): dropout / BatchNorm1d branches of post_conv are disabled
    # (dropout=0, batch_norm=False) to keep the forward deterministic.

    a_all = pack_adjs(adjs)
    w_packed = pack_params(params)

    out = forward(x, a_all, w_packed)
    out = jax.tree_util.tree_map(jax.block_until_ready, out)

    ref = forward_ref(x, adjs, params)
    # rsqrt(max(||x||^2,1e-24)) vs x/max(||x||,1e-12): mathematically equal,
    # EUP approximation precision -> relaxed tolerance.
    for nt in NODE_TYPES:
        np.testing.assert_allclose(np.asarray(out[nt]), np.asarray(ref[nt]),
                                   rtol=2e-4, atol=2e-4)

    print("KERNEL_OK")
</pallas_src>

<mosaic_0001>
module attributes {stable_mosaic.version = 11 : i64} {
  func.func @_fused_forward_kernel(%arg0: i32, %arg1: memref<40x40xf32, #tpu.memory_space<vmem>>, %arg2: memref<40x32xf32, #tpu.memory_space<vmem>>, %arg3: memref<2x104x64xf32, #tpu.memory_space<vmem>>, %arg4: memref<40x32xf32, #tpu.memory_space<vmem>>) attributes {dimension_semantics = [#tpu.dimension_semantics<arbitrary>], iteration_bounds = array<i64: 1>, scalar_prefetch = 0 : i64, scratch_operands = 0 : i64, tpu.core_type = #tpu.core_type<tc>, window_params = [{pipeline_mode = #tpu.pipeline_mode<synchronous>, transform_indices = @transform_0, window_bounds = array<i64: 40, 40>}, {pipeline_mode = #tpu.pipeline_mode<synchronous>, transform_indices = @transform_1, window_bounds = array<i64: 40, 32>}, {pipeline_mode = #tpu.pipeline_mode<synchronous>, transform_indices = @transform_2, window_bounds = array<i64: 2, 104, 64>}, {pipeline_mode = #tpu.pipeline_mode<synchronous>, transform_indices = @transform_3, window_bounds = array<i64: 40, 32>}]} {
    %c0 = arith.constant 0 : index
    %c0_0 = arith.constant 0 : index
    %0 = vector.load %arg1[%c0, %c0_0] : memref<40x40xf32, #tpu.memory_space<vmem>>, vector<40x40xf32>
    %c0_1 = arith.constant 0 : index
    %c0_2 = arith.constant 0 : index
    %1 = vector.load %arg2[%c0_1, %c0_2] : memref<40x32xf32, #tpu.memory_space<vmem>>, vector<40x32xf32>
    %2 = tpu.iota {dimensions = array<i32: 0>} : vector<40x1xi32>
    %c16_i32 = arith.constant 16 : i32
    %3 = vector.broadcast %c16_i32 : i32 to vector<40x1xi32>
    %4 = arith.cmpi slt, %2, %3 : vector<40x1xi32>
    %5 = arith.extui %4 : vector<40x1xi1> to vector<40x1xi32>
    %6 = arith.sitofp %5 : vector<40x1xi32> to vector<40x1xf32>
    %cst = arith.constant 1.000000e+00 : f32
    %7 = vector.broadcast %cst : f32 to vector<40x1xf32>
    %8 = arith.subf %7, %6 : vector<40x1xf32>
    %c0_3 = arith.constant 0 : index
    %c0_4 = arith.constant 0 : index
    %c0_5 = arith.constant 0 : index
    %9 = vector.load %arg3[%c0_3, %c0_4, %c0_5] : memref<2x104x64xf32, #tpu.memory_space<vmem>>, vector<1x96x64xf32>
    %10 = vector.shape_cast %9 : vector<1x96x64xf32> to vector<96x64xf32>
    %c0_6 = arith.constant 0 : index
    %c96 = arith.constant 96 : index
    %c0_7 = arith.constant 0 : index
    %11 = vector.load %arg3[%c0_6, %c96, %c0_7] : memref<2x104x64xf32, #tpu.memory_space<vmem>>, vector<1x1x64xf32>
    %12 = vector.shape_cast %11 : vector<1x1x64xf32> to vector<1x64xf32>
    %13 = vector.broadcast %6 : vector<40x1xf32> to vector<40x32xf32>
    %14 = arith.mulf %1, %13 : vector<40x32xf32>
    %15 = vector.broadcast %8 : vector<40x1xf32> to vector<40x32xf32>
    %16 = arith.mulf %1, %15 : vector<40x32xf32>
    %17 = tpu.concatenate %14, %16 in 1 : vector<40x32xf32>, vector<40x32xf32> -> vector<40x64xf32>
    %cst_8 = arith.constant dense<0.000000e+00> : vector<40x64xf32>
    %18 = tpu.matmul %0, %17, %cst_8 {dimension_numbers = #tpu.dot_dimension_numbers<[1], [0], [0], [1], [0, 0, 1, 1], [], []>} : vector<40x40xf32>, vector<40x64xf32>, vector<40x64xf32> -> vector<40x64xf32>
    %19 = tpu.concatenate %18, %1 in 1 : vector<40x64xf32>, vector<40x32xf32> -> vector<40x96xf32>
    %cst_9 = arith.constant dense<0.000000e+00> : vector<40x64xf32>
    %20 = tpu.matmul %19, %10, %cst_9 {dimension_numbers = #tpu.dot_dimension_numbers<[1], [0], [0], [1], [0, 0, 1, 1], [], []>} : vector<40x96xf32>, vector<96x64xf32>, vector<40x64xf32> -> vector<40x64xf32>
    %21 = vector.broadcast %12 : vector<1x64xf32> to vector<40x64xf32>
    %22 = arith.addf %20, %21 : vector<40x64xf32>
    %23 = vector.extract_strided_slice %22 {offsets = [0, 0], sizes = [40, 32], strides = [1, 1]} : vector<40x64xf32> to vector<40x32xf32>
    %24 = vector.extract_strided_slice %22 {offsets = [0, 32], sizes = [40, 32], strides = [1, 1]} : vector<40x64xf32> to vector<40x32xf32>
    %25 = vector.shape_cast %4 : vector<40x1xi1> to vector<40x1xi1>
    %26 = vector.broadcast %25 : vector<40x1xi1> to vector<40x32xi1>
    %27 = arith.select %26, %23, %24 : vector<40x32xi1>, vector<40x32xf32>
    %cst_10 = arith.constant 0.000000e+00 : f32
    %28 = vector.broadcast %cst_10 : f32 to vector<40x32xf32>
    %29 = arith.cmpf oge, %27, %28 : vector<40x32xf32>
    %cst_11 = arith.constant 0.00999999977 : f32
    %30 = vector.broadcast %cst_11 : f32 to vector<40x32xf32>
    %31 = arith.mulf %30, %27 : vector<40x32xf32>
    %32 = arith.select %29, %27, %31 : vector<40x32xi1>, vector<40x32xf32>
    %33 = arith.addf %32, %1 : vector<40x32xf32>
    %34 = arith.mulf %33, %33 : vector<40x32xf32>
    %cst_12 = arith.constant dense<0.000000e+00> : vector<40xf32>
    %35 = vector.multi_reduction <add>, %34, %cst_12 [1] : vector<40x32xf32> to vector<40xf32>
    %36 = vector.shape_cast %35 : vector<40xf32> to vector<40x1xf32>
    %cst_13 = arith.constant 1.000000e-24 : f32
    %37 = vector.broadcast %cst_13 : f32 to vector<40x1xf32>
    %38 = arith.maximumf %36, %37 : vector<40x1xf32>
    %39 = math.rsqrt %38 : vector<40x1xf32>
    %40 = vector.broadcast %39 : vector<40x1xf32> to vector<40x32xf32>
    %41 = arith.mulf %33, %40 : vector<40x32xf32>
    %c1 = arith.constant 1 : index
    %c0_14 = arith.constant 0 : index
    %c0_15 = arith.constant 0 : index
    %42 = vector.load %arg3[%c1, %c0_14, %c0_15] : memref<2x104x64xf32, #tpu.memory_space<vmem>>, vector<1x96x64xf32>
    %43 = vector.shape_cast %42 : vector<1x96x64xf32> to vector<96x64xf32>
    %c1_16 = arith.constant 1 : index
    %c96_17 = arith.constant 96 : index
    %c0_18 = arith.constant 0 : index
    %44 = vector.load %arg3[%c1_16, %c96_17, %c0_18] : memref<2x104x64xf32, #tpu.memory_space<vmem>>, vector<1x1x64xf32>
    %45 = vector.shape_cast %44 : vector<1x1x64xf32> to vector<1x64xf32>
    %46 = vector.broadcast %6 : vector<40x1xf32> to vector<40x32xf32>
    %47 = arith.mulf %41, %46 : vector<40x32xf32>
    %48 = vector.broadcast %8 : vector<40x1xf32> to vector<40x32xf32>
    %49 = arith.mulf %41, %48 : vector<40x32xf32>
    %50 = tpu.concatenate %47, %49 in 1 : vector<40x32xf32>, vector<40x32xf32> -> vector<40x64xf32>
    %cst_19 = arith.constant dense<0.000000e+00> : vector<40x64xf32>
    %51 = tpu.matmul %0, %50, %cst_19 {dimension_numbers = #tpu.dot_dimension_numbers<[1], [0], [0], [1], [0, 0, 1, 1], [], []>} : vector<40x40xf32>, vector<40x64xf32>, vector<40x64xf32> -> vector<40x64xf32>
    %52 = tpu.concatenate %51, %41 in 1 : vector<40x64xf32>, vector<40x32xf32> -> vector<40x96xf32>
    %cst_20 = arith.constant dense<0.000000e+00> : vector<40x64xf32>
    %53 = tpu.matmul %52, %43, %cst_20 {dimension_numbers = #tpu.dot_dimension_numbers<[1], [0], [0], [1], [0, 0, 1, 1], [], []>} : vector<40x96xf32>, vector<96x64xf32>, vector<40x64xf32> -> vector<40x64xf32>
    %54 = vector.broadcast %45 : vector<1x64xf32> to vector<40x64xf32>
    %55 = arith.addf %53, %54 : vector<40x64xf32>
    %56 = vector.extract_strided_slice %55 {offsets = [0, 0], sizes = [40, 32], strides = [1, 1]} : vector<40x64xf32> to vector<40x32xf32>
    %57 = vector.extract_strided_slice %55 {offsets = [0, 32], sizes = [40, 32], strides = [1, 1]} : vector<40x64xf32> to vector<40x32xf32>
    %58 = vector.shape_cast %4 : vector<40x1xi1> to vector<40x1xi1>
    %59 = vector.broadcast %58 : vector<40x1xi1> to vector<40x32xi1>
    %60 = arith.select %59, %56, %57 : vector<40x32xi1>, vector<40x32xf32>
    %cst_21 = arith.constant 0.000000e+00 : f32
    %61 = vector.broadcast %cst_21 : f32 to vector<40x32xf32>
    %62 = arith.cmpf oge, %60, %61 : vector<40x32xf32>
    %cst_22 = arith.constant 0.00999999977 : f32
    %63 = vector.broadcast %cst_22 : f32 to vector<40x32xf32>
    %64 = arith.mulf %63, %60 : vector<40x32xf32>
    %65 = arith.select %62, %60, %64 : vector<40x32xi1>, vector<40x32xf32>
    %66 = arith.addf %65, %41 : vector<40x32xf32>
    %67 = arith.mulf %66, %66 : vector<40x32xf32>
    %cst_23 = arith.constant dense<0.000000e+00> : vector<40xf32>
    %68 = vector.multi_reduction <add>, %67, %cst_23 [1] : vector<40x32xf32> to vector<40xf32>
    %69 = vector.shape_cast %68 : vector<40xf32> to vector<40x1xf32>
    %cst_24 = arith.constant 1.000000e-24 : f32
    %70 = vector.broadcast %cst_24 : f32 to vector<40x1xf32>
    %71 = arith.maximumf %69, %70 : vector<40x1xf32>
    %72 = math.rsqrt %71 : vector<40x1xf32>
    %73 = vector.broadcast %72 : vector<40x1xf32> to vector<40x32xf32>
    %74 = arith.mulf %66, %73 : vector<40x32xf32>
    %75 = arith.maximumf %41, %74 : vector<40x32xf32>
    %c0_25 = arith.constant 0 : index
    %c0_26 = arith.constant 0 : index
    %76 = vector.load %arg4[%c0_25, %c0_26] : memref<40x32xf32, #tpu.memory_space<vmem>>, vector<40x32xf32>
    tpu.vector_store %arg4[%c0_25, %c0_26], %75 {strides = array<i32>} : memref<40x32xf32, #tpu.memory_space<vmem>>, vector<40x32xf32>,
    return
  }
  func.func @transform_0(%arg0: i32) -> (i32, i32) {
    %c0_i32 = arith.constant 0 : i32
    %c0_i32_0 = arith.constant 0 : i32
    %c0_i32_1 = arith.constant 0 : i32
    return %c0_i32, %c0_i32_0 : i32, i32
  }
  func.func @transform_1(%arg0: i32) -> (i32, i32) {
    %c0_i32 = arith.constant 0 : i32
    %c0_i32_0 = arith.constant 0 : i32
    %c0_i32_1 = arith.constant 0 : i32
    return %c0_i32, %c0_i32_0 : i32, i32
  }
  func.func @transform_2(%arg0: i32) -> (i32, i32, i32) {
    %c0_i32 = arith.constant 0 : i32
    %c0_i32_0 = arith.constant 0 : i32
    %c0_i32_1 = arith.constant 0 : i32
    %c0_i32_2 = arith.constant 0 : i32
    return %c0_i32, %c0_i32_0, %c0_i32_1 : i32, i32, i32
  }
  func.func @transform_3(%arg0: i32) -> (i32, i32) {
    %c0_i32 = arith.constant 0 : i32
    %c0_i32_0 = arith.constant 0 : i32
    %c0_i32_1 = arith.constant 0 : i32
    return %c0_i32, %c0_i32_0 : i32, i32
  }
}

</mosaic_0001>

<llo_original>
// kernel: tpu_custom_call.1
$region0: #{tpu_custom_call.1}
  #allocation0 [shape = 'u32[]', space=smem, size = 0x4, offset = 0x4, fixed_abs, tag = 'smem constant byte address 0x4 - core index']
  #allocation1 [shape = 'u32[144,128]{1,0:T(1,128)}', space=vmem, size = 0x12000, scoped, tag = 'internal scratch']
  %s0 = inlined_call_operand.vmem [shape: f32[40,40], index: 0, kind: input, shape index: {}]
  %s1 = inlined_call_operand.vmem [shape: f32[40,32], index: 1, kind: input, shape index: {}]
  %s2 = inlined_call_operand.vmem [shape: f32[2,104,64], index: 2, kind: input, shape index: {}]
  %s3 = inlined_call_operand.vmem [shape: f32[40,32], index: 3, kind: output, shape index: {}]
  %s4 = sld [smem:[#allocation0]]
  $region22: #{tpu_custom_call.1} parent=0
    _
  %s6 = ssub.s32 1, %s4
  %s7 = scalar_select 0, %s6, %s4
  // Predicated region
  $region2: #{tpu_custom_call.1} parent=0 // pred_check
    _
  $region3: #{tpu_custom_call.1} parent=0 // pred_check_branch
    %9 = sbr.rel (0) target = $region5
  $region4: #{tpu_custom_call.1} parent=0 // pred_region
    _
  $region5: #{tpu_custom_call.1} parent=0 // pred_fallthru
    _
  // Predicated region
  $region6: #{tpu_custom_call.1} parent=0 // pred_check
    _
  $region7: #{tpu_custom_call.1} parent=0 // pred_check_branch
    %11 = sbr.rel (0) target = $region9
  $region8: #{tpu_custom_call.1} parent=0 // pred_region
    _
  $region9: #{tpu_custom_call.1} parent=0 // pred_fallthru
    _
  // Predicated region
  $region10: #{tpu_custom_call.1} parent=0 // pred_check
    _
  $region11: #{tpu_custom_call.1} parent=0 // pred_check_branch
    %13 = sbr.rel (0) target = $region13
  $region12: #{tpu_custom_call.1} parent=0 // pred_region
    _
  $region13: #{tpu_custom_call.1} parent=0 // pred_fallthru
    _
  %v14 = vld [vmem:[%s0] sm:$0xff]
  %v15 = vld [vmem:[%s0 + $0x8] sm:$0xff]
  %v16 = vld [vmem:[%s0 + $0x10] sm:$0xff]
  %v17 = vld [vmem:[%s0 + $0x18] sm:$0xff]
  %v18 = vld [vmem:[%s0 + $0x20] sm:$0xff]
  %v19 = vld [vmem:[%s1] sm:$0xff]
  %v20 = vld [vmem:[%s1 + $0x8] sm:$0xff]
  %v21 = vld [vmem:[%s1 + $0x10] sm:$0xff]
  %v22 = vld [vmem:[%s1 + $0x18] sm:$0xff]
  %v23 = vld [vmem:[%s1 + $0x20] sm:$0xff]
  %v24 = vlaneseq
  %v25 = vshrl.u32 %v24, 7
  %v26 = vadd.s32 %v25, 8
  %v27 = vadd.s32 %v25, 16
  %v28 = vadd.s32 %v25, 24
  %v29 = vadd.s32 %v25, 32
  %vm30 = vcmp.lt.s32.totalorder %v25, 16
  %vm31 = vcmp.lt.s32.totalorder %v26, 16
  %vm32 = vcmp.lt.s32.totalorder %v27, 16
  %vm33 = vcmp.lt.s32.totalorder %v28, 16
  %vm34 = vcmp.lt.s32.totalorder %v29, 16
  %v35 = vsel %vm30, 1, 0
  %v36 = vsel %vm31, 1, 0
  %v37 = vsel %vm32, 1, 0
  %v38 = vsel %vm33, 1, 0
  %v39 = vsel %vm34, 1, 0
  %v40 = vcvt.s32.f32 %v35
  %v41 = vcvt.s32.f32 %v36
  %v42 = vcvt.s32.f32 %v37
  %v43 = vcvt.s32.f32 %v38
  %v44 = vcvt.s32.f32 %v39
  %v45 = vsub.f32 1.0, %v40
  %v46 = vsub.f32 1.0, %v41
  %v47 = vsub.f32 1.0, %v42
  %v48 = vsub.f32 1.0, %v43
  %v49 = vsub.f32 1.0, %v44
  %v50 = vld [vmem:[%s2] sm:$0xff]
  %v51 = vld [vmem:[%s2 + $0x8] sm:$0xff]
  %v52 = vld [vmem:[%s2 + $0x10] sm:$0xff]
  %v53 = vld [vmem:[%s2 + $0x18] sm:$0xff]
  %v54 = vld [vmem:[%s2 + $0x20] sm:$0xff]
  %v55 = vld [vmem:[%s2 + $0x28] sm:$0xff]
  %v56 = vld [vmem:[%s2 + $0x30] sm:$0xff]
  %v57 = vld [vmem:[%s2 + $0x38] sm:$0xff]
  %v58 = vld [vmem:[%s2 + $0x40] sm:$0xff]
  %v59 = vld [vmem:[%s2 + $0x48] sm:$0xff]
  %v60 = vld [vmem:[%s2 + $0x50] sm:$0xff]
  %v61 = vld [vmem:[%s2 + $0x58] sm:$0xff]
  %v62 = vld [vmem:[%s2 + $0x60] sm:$0x1]
  %v63 = vmul.f32 %v19, %v40
  %v64 = vmul.f32 %v20, %v41
  %v65 = vmul.f32 %v21, %v42
  %v66 = vmul.f32 %v22, %v43
  %v67 = vmul.f32 %v23, %v44
  %v68 = vmul.f32 %v19, %v45
  %v69 = vmul.f32 %v20, %v46
  %v70 = vmul.f32 %v21, %v47
  %v71 = vmul.f32 %v22, %v48
  %v72 = vmul.f32 %v23, %v49
  %78 = vrot.lane.b32.xlu0 %v68, 32
  %v79 = vpop.permute.xlu0 %78
  %80 = vrot.lane.b32.xlu0 %v69, 32
  %v81 = vpop.permute.xlu0 %80
  %82 = vrot.lane.b32.xlu0 %v70, 32
  %v83 = vpop.permute.xlu0 %82
  %84 = vrot.lane.b32.xlu0 %v71, 32
  %v85 = vpop.permute.xlu0 %84
  %86 = vrot.lane.b32.xlu0 %v72, 32
  %v87 = vpop.permute.xlu0 %86
  %vm93 = vcmask 261120
  %v94 = vsel %vm93, %v63, %v79
  %v95 = vsel %vm93, %v64, %v81
  %v96 = vsel %vm93, %v65, %v83
  %v97 = vsel %vm93, %v66, %v85
  %v98 = vsel %vm93, %v67, %v87
  %vm99 = vcmask 326656
  %v101 = vsel %vm99, %v14, 0
  %v104 = vsel %vm99, %v15, 0
  %v107 = vsel %vm99, %v16, 0
  %v110 = vsel %vm99, %v17, 0
  %v113 = vsel %vm99, %v18, 0
  %115 = vmatprep.subr.mxu0 0.0
  %116 = vmatpush1.msra.mxu0 %v94
  %117 = vmatprep.subr.mxu0 0.0
  %118 = vmatpush1.msra.mxu0 %v95
  %119 = vmatprep.subr.mxu0 0.0
  %120 = vmatpush1.msra.mxu0 %v96
  %121 = vmatprep.subr.mxu0 0.0
  %122 = vmatpush1.msra.mxu0 %v97
  %123 = vmatprep.subr.mxu0 0.0
  %124 = vmatpush1.msra.mxu0 %v98
  %125 = vmatprep.subr.mxu0 0.0
  %126 = vmatpush1.msra.mxu0 0.0
  %127 = vmatprep.subr.mxu0 0.0
  %128 = vmatpush1.msra.mxu0 0.0
  %129 = vmatprep.subr.mxu0 0.0
  %130 = vmatpush1.msra.mxu0 0.0
  %131 = vmatprep.subr.mxu0 0.0
  %132 = vmatpush1.msra.mxu0 0.0
  %133 = vmatprep.subr.mxu0 0.0
  %134 = vmatpush1.msra.mxu0 0.0
  %135 = vmatprep.subr.mxu0 0.0
  %136 = vmatpush1.msra.mxu0 0.0
  %137 = vmatprep.subr.mxu0 0.0
  %138 = vmatpush1.msra.mxu0 0.0
  %139 = vmatprep.subr.mxu0 0.0
  %140 = vmatpush1.msra.mxu0 0.0
  %141 = vmatprep.subr.mxu0 0.0
  %142 = vmatpush1.msra.mxu0 0.0
  %143 = vmatprep.subr.mxu0 0.0
  %144 = vmatpush1.msra.mxu0 0.0
  %145 = vmatprep.subr.mxu0 0.0
  %146 = vmatpush1.msra.mxu0 0.0
  %147 = vmatprep.subr.mxu0 0.0
  %148 = vmatpush1.msra.mxu0 0.0
  %149 = vmatprep.subr.mxu0 0.0
  %150 = vmatpush1.msra.mxu0 0.0
  %151 = vmatprep.subr.mxu0 0.0
  %152 = vmatpush1.msra.mxu0 0.0
  %153 = vmatprep.subr.mxu0 0.0
  %154 = vmatpush1.msra.mxu0 0.0
  %155 = vmatprep.subr.mxu0 0.0
  %156 = vmatpush1.msra.mxu0 0.0
  %157 = vmatprep.subr.mxu0 0.0
  %158 = vmatpush1.msra.mxu0 0.0
  %159 = vmatprep.subr.mxu0 0.0
  %160 = vmatpush1.msra.mxu0 0.0
  %161 = vmatprep.subr.mxu0 0.0
  %162 = vmatpush1.msra.mxu0 0.0
  %163 = vmatprep.subr.mxu0 0.0
  %164 = vmatpush1.msra.mxu0 0.0
  %165 = vmatprep.subr.mxu0 0.0
  %166 = vmatpush1.msra.mxu0 0.0
  %167 = vmatprep.subr.mxu0 0.0
  %168 = vmatpush1.msra.mxu0 0.0
  %169 = vmatprep.subr.mxu0 0.0
  %170 = vmatpush1.msra.mxu0 0.0
  %171 = vmatprep.subr.mxu0 0.0
  %172 = vmatpush1.msra.mxu0 0.0
  %173 = vmatprep.subr.mxu0 0.0
  %174 = vmatpush1.msra.mxu0 0.0
  %175 = vmatprep.subr.mxu0 0.0
  %176 = vmatpush1.msra.mxu0 0.0
  %177 = vmatprep.subr.mxu0 0.0
  %178 = vmatpush1.msra.mxu0 0.0
  %179 = vmatprep.mubr.f32.mxu0 0.0
  %180 = vmatmul.mubr.f32.gmra.mrb[0].mxu0 %v101
  %v181 = vpop.f32.mrb[0].mxu0
  %v182 = vadd.f32 0.0, %v181
  %v183 = vpop.f32.mrb[0].mxu0
  %184 = vmatprep.mubr.f32.mxu0 0.0
  %185 = vmatmul.mubr.f32.gmra.mrb[0].mxu0 %v104
  %v186 = vpop.f32.mrb[0].mxu0
  %v187 = vadd.f32 0.0, %v186
  %v188 = vpop.f32.mrb[0].mxu0
  %189 = vmatprep.mubr.f32.mxu0 0.0
  %190 = vmatmul.mubr.f32.gmra.mrb[0].mxu0 %v107
  %v191 = vpop.f32.mrb[0].mxu0
  %v192 = vadd.f32 0.0, %v191
  %v193 = vpop.f32.mrb[0].mxu0
  %194 = vmatprep.mubr.f32.mxu0 0.0
  %195 = vmatmul.mubr.f32.gmra.mrb[0].mxu0 %v110
  %v196 = vpop.f32.mrb[0].mxu0
  %v197 = vadd.f32 0.0, %v196
  %v198 = vpop.f32.mrb[0].mxu0
  %199 = vmatprep.mubr.f32.mxu0 0.0
  %200 = vmatmul.mubr.f32.gmra.mrb[0].mxu0 %v113
  %v201 = vpop.f32.mrb[0].mxu0
  %v202 = vadd.f32 0.0, %v201
  %v203 = vpop.f32.mrb[0].mxu0
  %204 = vdwg.mxu0
  %210 = vrot.lane.b32.xlu0 %v19, 64
  %v211 = vpop.permute.xlu0 %210
  %212 = vrot.lane.b32.xlu0 %v20, 64
  %v213 = vpop.permute.xlu0 %212
  %214 = vrot.lane.b32.xlu0 %v21, 64
  %v215 = vpop.permute.xlu0 %214
  %216 = vrot.lane.b32.xlu0 %v22, 64
  %v217 = vpop.permute.xlu0 %216
  %218 = vrot.lane.b32.xlu0 %v23, 64
  %v219 = vpop.permute.xlu0 %218
  %vm225 = vcmask 523264
  %v226 = vsel %vm225, %v182, %v211
  %v227 = vsel %vm225, %v187, %v213
  %v228 = vsel %vm225, %v192, %v215
  %v229 = vsel %vm225, %v197, %v217
  %v230 = vsel %vm225, %v202, %v219
  %v231 = vlaneseq
  %v232 = vshrl.u32 %v231, 7
  %v233 = vsub.s32 0, %v232
  %v234 = vrot.slane %v62, %v233
  %vm235 = vcmask 785408
  %v237 = vsel %vm235, %v226, 0
  %v240 = vsel %vm235, %v227, 0
  %v243 = vsel %vm235, %v228, 0
  %v246 = vsel %vm235, %v229, 0
  %v249 = vsel %vm235, %v230, 0
  %251 = vmatprep.subr.mxu0 0.0
  %252 = vmatpush1.msra.mxu0 %v50
  %253 = vmatprep.subr.mxu0 0.0
  %254 = vmatpush1.msra.mxu0 %v51
  %255 = vmatprep.subr.mxu0 0.0
  %256 = vmatpush1.msra.mxu0 %v52
  %257 = vmatprep.subr.mxu0 0.0
  %258 = vmatpush1.msra.mxu0 %v53
  %259 = vmatprep.subr.mxu0 0.0
  %260 = vmatpush1.msra.mxu0 %v54
  %261 = vmatprep.subr.mxu0 0.0
  %262 = vmatpush1.msra.mxu0 %v55
  %263 = vmatprep.subr.mxu0 0.0
  %264 = vmatpush1.msra.mxu0 %v56
  %265 = vmatprep.subr.mxu0 0.0
  %266 = vmatpush1.msra.mxu0 %v57
  %267 = vmatprep.subr.mxu0 0.0
  %268 = vmatpush1.msra.mxu0 %v58
  %269 = vmatprep.subr.mxu0 0.0
  %270 = vmatpush1.msra.mxu0 %v59
  %271 = vmatprep.subr.mxu0 0.0
  %272 = vmatpush1.msra.mxu0 %v60
  %273 = vmatprep.subr.mxu0 0.0
  %274 = vmatpush1.msra.mxu0 %v61
  %275 = vmatprep.subr.mxu0 0.0
  %276 = vmatpush1.msra.mxu0 0.0
  %277 = vmatprep.subr.mxu0 0.0
  %278 = vmatpush1.msra.mxu0 0.0
  %279 = vmatprep.subr.mxu0 0.0
  %280 = vmatpush1.msra.mxu0 0.0
  %281 = vmatprep.subr.mxu0 0.0
  %282 = vmatpush1.msra.mxu0 0.0
  %283 = vmatprep.subr.mxu0 0.0
  %284 = vmatpush1.msra.mxu0 0.0
  %285 = vmatprep.subr.mxu0 0.0
  %286 = vmatpush1.msra.mxu0 0.0
  %287 = vmatprep.subr.mxu0 0.0
  %288 = vmatpush1.msra.mxu0 0.0
  %289 = vmatprep.subr.mxu0 0.0
  %290 = vmatpush1.msra.mxu0 0.0
  %291 = vmatprep.subr.mxu0 0.0
  %292 = vmatpush1.msra.mxu0 0.0
  %293 = vmatprep.subr.mxu0 0.0
  %294 = vmatpush1.msra.mxu0 0.0
  %295 = vmatprep.subr.mxu0 0.0
  %296 = vmatpush1.msra.mxu0 0.0
  %297 = vmatprep.subr.mxu0 0.0
  %298 = vmatpush1.msra.mxu0 0.0
  %299 = vmatprep.subr.mxu0 0.0
  %300 = vmatpush1.msra.mxu0 0.0
  %301 = vmatprep.subr.mxu0 0.0
  %302 = vmatpush1.msra.mxu0 0.0
  %303 = vmatprep.subr.mxu0 0.0
  %304 = vmatpush1.msra.mxu0 0.0
  %305 = vmatprep.subr.mxu0 0.0
  %306 = vmatpush1.msra.mxu0 0.0
  %307 = vmatprep.subr.mxu0 0.0
  %308 = vmatpush1.msra.mxu0 0.0
  %309 = vmatprep.subr.mxu0 0.0
  %310 = vmatpush1.msra.mxu0 0.0
  %311 = vmatprep.subr.mxu0 0.0
  %312 = vmatpush1.msra.mxu0 0.0
  %313 = vmatprep.subr.mxu0 0.0
  %314 = vmatpush1.msra.mxu0 0.0
  %315 = vmatprep.mubr.f32.mxu0 0.0
  %316 = vmatmul.mubr.f32.gmra.mrb[0].mxu0 %v237
  %v317 = vpop.f32.mrb[0].mxu0
  %v318 = vadd.f32 %v234, %v317
  %v319 = vpop.f32.mrb[0].mxu0
  %320 = vmatprep.mubr.f32.mxu0 0.0
  %321 = vmatmul.mubr.f32.gmra.mrb[0].mxu0 %v240
  %v322 = vpop.f32.mrb[0].mxu0
  %v323 = vadd.f32 %v234, %v322
  %v324 = vpop.f32.mrb[0].mxu0
  %325 = vmatprep.mubr.f32.mxu0 0.0
  %326 = vmatmul.mubr.f32.gmra.mrb[0].mxu0 %v243
  %v327 = vpop.f32.mrb[0].mxu0
  %v328 = vadd.f32 %v234, %v327
  %v329 = vpop.f32.mrb[0].mxu0
  %330 = vmatprep.mubr.f32.mxu0 0.0
  %331 = vmatmul.mubr.f32.gmra.mrb[0].mxu0 %v246
  %v332 = vpop.f32.mrb[0].mxu0
  %v333 = vadd.f32 %v234, %v332
  %v334 = vpop.f32.mrb[0].mxu0
  %335 = vmatprep.mubr.f32.mxu0 0.0
  %336 = vmatmul.mubr.f32.gmra.mrb[0].mxu0 %v249
  %v337 = vpop.f32.mrb[0].mxu0
  %v338 = vadd.f32 %v234, %v337
  %v339 = vpop.f32.mrb[0].mxu0
  %340 = vdwg.mxu0
  %vm341 = vcmp.eq.s32.totalorder %v35, 1
  %vm342 = vcmp.eq.s32.totalorder %v36, 1
  %vm343 = vcmp.eq.s32.totalorder %v37, 1
  %vm344 = vcmp.eq.s32.totalorder %v38, 1
  %vm345 = vcmp.eq.s32.totalorder %v39, 1
  %351 = vrot.lane.b32.xlu0 %v318, 96
  %v352 = vpop.permute.xlu0 %351
  %353 = vrot.lane.b32.xlu0 %v323, 96
  %v354 = vpop.permute.xlu0 %353
  %355 = vrot.lane.b32.xlu0 %v328, 96
  %v356 = vpop.permute.xlu0 %355
  %357 = vrot.lane.b32.xlu0 %v333, 96
  %v358 = vpop.permute.xlu0 %357
  %359 = vrot.lane.b32.xlu0 %v338, 96
  %v360 = vpop.permute.xlu0 %359
  %v366 = vsel %vm341, %v318, %v352
  %v367 = vsel %vm342, %v323, %v354
  %v368 = vsel %vm343, %v328, %v356
  %v369 = vsel %vm344, %v333, %v358
  %v370 = vsel %vm345, %v338, %v360
  %vm371 = vcmp.ge.f32.partialorder %v366, 0.0
  %vm372 = vcmp.ge.f32.partialorder %v367, 0.0
  %vm373 = vcmp.ge.f32.partialorder %v368, 0.0
  %vm374 = vcmp.ge.f32.partialorder %v369, 0.0
  %vm375 = vcmp.ge.f32.partialorder %v370, 0.0
  %v376 = vmul.f32 %v366, 0.01
  %v377 = vmul.f32 %v367, 0.01
  %v378 = vmul.f32 %v368, 0.01
  %v379 = vmul.f32 %v369, 0.01
  %v380 = vmul.f32 %v370, 0.01
  %v381 = vsel %vm371, %v366, %v376
  %v382 = vsel %vm372, %v367, %v377
  %v383 = vsel %vm373, %v368, %v378
  %v384 = vsel %vm374, %v369, %v379
  %v385 = vsel %vm375, %v370, %v380
  %v386 = vadd.f32 %v381, %v19
  %v387 = vadd.f32 %v382, %v20
  %v388 = vadd.f32 %v383, %v21
  %v389 = vadd.f32 %v384, %v22
  %v390 = vadd.f32 %v385, %v23
  %v391 = vmul.f32 %v386, %v386
  %v392 = vmul.f32 %v387, %v387
  %v393 = vmul.f32 %v388, %v388
  %v394 = vmul.f32 %v389, %v389
  %v395 = vmul.f32 %v390, %v390
  %v396 = vsel %vm93, %v391, 0.0
  %397 = vadd.xlane.f32.xlu0 %v396
  %v398 = vpop.xlane.xlu0 %397
  %v399 = vsel %vm93, %v392, 0.0
  %400 = vadd.xlane.f32.xlu0 %v399
  %v401 = vpop.xlane.xlu0 %400
  %v402 = vsel %vm93, %v393, 0.0
  %403 = vadd.xlane.f32.xlu0 %v402
  %v404 = vpop.xlane.xlu0 %403
  %v405 = vsel %vm93, %v394, 0.0
  %406 = vadd.xlane.f32.xlu0 %v405
  %v407 = vpop.xlane.xlu0 %406
  %v408 = vsel %vm93, %v395, 0.0
  %409 = vadd.xlane.f32.xlu0 %v408
  %v410 = vpop.xlane.xlu0 %409
  %v411 = vmax.f32 %v398, 1e-24
  %v412 = vmax.f32 %v401, 1e-24
  %v413 = vmax.f32 %v404, 1e-24
  %v414 = vmax.f32 %v407, 1e-24
  %v415 = vmax.f32 %v410, 1e-24
  %v416 = vrsqrt.pop %v411
  %v417 = vrsqrt.pop %v412
  %v418 = vrsqrt.pop %v413
  %v419 = vrsqrt.pop %v414
  %v420 = vrsqrt.pop %v415
  %v421 = vmul.f32 %v386, %v416
  %v422 = vmul.f32 %v387, %v417
  %v423 = vmul.f32 %v388, %v418
  %v424 = vmul.f32 %v389, %v419
  %v425 = vmul.f32 %v390, %v420
  %s426 = scalar_lea.vmem %s2, 104
  %v427 = vld [vmem:[%s426] sm:$0xff]
  %v428 = vld [vmem:[%s426 + $0x8] sm:$0xff]
  %v429 = vld [vmem:[%s426 + $0x10] sm:$0xff]
  %v430 = vld [vmem:[%s426 + $0x18] sm:$0xff]
  %v431 = vld [vmem:[%s426 + $0x20] sm:$0xff]
  %v432 = vld [vmem:[%s426 + $0x28] sm:$0xff]
  %v433 = vld [vmem:[%s426 + $0x30] sm:$0xff]
  %v434 = vld [vmem:[%s426 + $0x38] sm:$0xff]
  %v435 = vld [vmem:[%s426 + $0x40] sm:$0xff]
  %v436 = vld [vmem:[%s426 + $0x48] sm:$0xff]
  %v437 = vld [vmem:[%s426 + $0x50] sm:$0xff]
  %v438 = vld [vmem:[%s426 + $0x58] sm:$0xff]
  %v439 = vld [vmem:[%s426 + $0x60] sm:$0x1]
  %v440 = vmul.f32 %v421, %v40
  %v441 = vmul.f32 %v422, %v41
  %v442 = vmul.f32 %v423, %v42
  %v443 = vmul.f32 %v424, %v43
  %v444 = vmul.f32 %v425, %v44
  %v445 = vmul.f32 %v421, %v45
  %v446 = vmul.f32 %v422, %v46
  %v447 = vmul.f32 %v423, %v47
  %v448 = vmul.f32 %v424, %v48
  %v449 = vmul.f32 %v425, %v49
  %455 = vrot.lane.b32.xlu0 %v445, 32
  %v456 = vpop.permute.xlu0 %455
  %457 = vrot.lane.b32.xlu0 %v446, 32
  %v458 = vpop.permute.xlu0 %457
  %459 = vrot.lane.b32.xlu0 %v447, 32
  %v460 = vpop.permute.xlu0 %459
  %461 = vrot.lane.b32.xlu0 %v448, 32
  %v462 = vpop.permute.xlu0 %461
  %463 = vrot.lane.b32.xlu0 %v449, 32
  %v464 = vpop.permute.xlu0 %463
  %v470 = vsel %vm93, %v440, %v456
  %v471 = vsel %vm93, %v441, %v458
  %v472 = vsel %vm93, %v442, %v460
  %v473 = vsel %vm93, %v443, %v462
  %v474 = vsel %vm93, %v444, %v464
  %475 = vmatprep.subr.mxu0 0.0
  %476 = vmatpush1.msra.mxu0 %v470
  %477 = vmatprep.subr.mxu0 0.0
  %478 = vmatpush1.msra.mxu0 %v471
  %479 = vmatprep.subr.mxu0 0.0
  %480 = vmatpush1.msra.mxu0 %v472
  %481 = vmatprep.subr.mxu0 0.0
  %482 = vmatpush1.msra.mxu0 %v473
  %483 = vmatprep.subr.mxu0 0.0
  %484 = vmatpush1.msra.mxu0 %v474
  %485 = vmatprep.subr.mxu0 0.0
  %486 = vmatpush1.msra.mxu0 0.0
  %487 = vmatprep.subr.mxu0 0.0
  %488 = vmatpush1.msra.mxu0 0.0
  %489 = vmatprep.subr.mxu0 0.0
  %490 = vmatpush1.msra.mxu0 0.0
  %491 = vmatprep.subr.mxu0 0.0
  %492 = vmatpush1.msra.mxu0 0.0
  %493 = vmatprep.subr.mxu0 0.0
  %494 = vmatpush1.msra.mxu0 0.0
  %495 = vmatprep.subr.mxu0 0.0
  %496 = vmatpush1.msra.mxu0 0.0
  %497 = vmatprep.subr.mxu0 0.0
  %498 = vmatpush1.msra.mxu0 0.0
  %499 = vmatprep.subr.mxu0 0.0
  %500 = vmatpush1.msra.mxu0 0.0
  %501 = vmatprep.subr.mxu0 0.0
  %502 = vmatpush1.msra.mxu0 0.0
  %503 = vmatprep.subr.mxu0 0.0
  %504 = vmatpush1.msra.mxu0 0.0
  %505 = vmatprep.subr.mxu0 0.0
  %506 = vmatpush1.msra.mxu0 0.0
  %507 = vmatprep.subr.mxu0 0.0
  %508 = vmatpush1.msra.mxu0 0.0
  %509 = vmatprep.subr.mxu0 0.0
  %510 = vmatpush1.msra.mxu0 0.0
  %511 = vmatprep.subr.mxu0 0.0
  %512 = vmatpush1.msra.mxu0 0.0
  %513 = vmatprep.subr.mxu0 0.0
  %514 = vmatpush1.msra.mxu0 0.0
  %515 = vmatprep.subr.mxu0 0.0
  %516 = vmatpush1.msra.mxu0 0.0
  %517 = vmatprep.subr.mxu0 0.0
  %518 = vmatpush1.msra.mxu0 0.0
  %519 = vmatprep.subr.mxu0 0.0
  %520 = vmatpush1.msra.mxu0 0.0
  %521 = vmatprep.subr.mxu0 0.0
  %522 = vmatpush1.msra.mxu0 0.0
  %523 = vmatprep.subr.mxu0 0.0
  %524 = vmatpush1.msra.mxu0 0.0
  %525 = vmatprep.subr.mxu0 0.0
  %526 = vmatpush1.msra.mxu0 0.0
  %527 = vmatprep.subr.mxu0 0.0
  %528 = vmatpush1.msra.mxu0 0.0
  %529 = vmatprep.subr.mxu0 0.0
  %530 = vmatpush1.msra.mxu0 0.0
  %531 = vmatprep.subr.mxu0 0.0
  %532 = vmatpush1.msra.mxu0 0.0
  %533 = vmatprep.subr.mxu0 0.0
  %534 = vmatpush1.msra.mxu0 0.0
  %535 = vmatprep.subr.mxu0 0.0
  %536 = vmatpush1.msra.mxu0 0.0
  %537 = vmatprep.subr.mxu0 0.0
  %538 = vmatpush1.msra.mxu0 0.0
  %539 = vmatprep.mubr.f32.mxu0 0.0
  %540 = vmatmul.mubr.f32.gmra.mrb[0].mxu0 %v101
  %v541 = vpop.f32.mrb[0].mxu0
  %v542 = vadd.f32 0.0, %v541
  %v543 = vpop.f32.mrb[0].mxu0
  %544 = vmatprep.mubr.f32.mxu0 0.0
  %545 = vmatmul.mubr.f32.gmra.mrb[0].mxu0 %v104
  %v546 = vpop.f32.mrb[0].mxu0
  %v547 = vadd.f32 0.0, %v546
  %v548 = vpop.f32.mrb[0].mxu0
  %549 = vmatprep.mubr.f32.mxu0 0.0
  %550 = vmatmul.mubr.f32.gmra.mrb[0].mxu0 %v107
  %v551 = vpop.f32.mrb[0].mxu0
  %v552 = vadd.f32 0.0, %v551
  %v553 = vpop.f32.mrb[0].mxu0
  %554 = vmatprep.mubr.f32.mxu0 0.0
  %555 = vmatmul.mubr.f32.gmra.mrb[0].mxu0 %v110
  %v556 = vpop.f32.mrb[0].mxu0
  %v557 = vadd.f32 0.0, %v556
  %v558 = vpop.f32.mrb[0].mxu0
  %559 = vmatprep.mubr.f32.mxu0 0.0
  %560 = vmatmul.mubr.f32.gmra.mrb[0].mxu0 %v113
  %v561 = vpop.f32.mrb[0].mxu0
  %v562 = vadd.f32 0.0, %v561
  %v563 = vpop.f32.mrb[0].mxu0
  %564 = vdwg.mxu0
  %570 = vrot.lane.b32.xlu0 %v421, 64
  %v571 = vpop.permute.xlu0 %570
  %572 = vrot.lane.b32.xlu0 %v422, 64
  %v573 = vpop.permute.xlu0 %572
  %574 = vrot.lane.b32.xlu0 %v423, 64
  %v575 = vpop.permute.xlu0 %574
  %576 = vrot.lane.b32.xlu0 %v424, 64
  %v577 = vpop.permute.xlu0 %576
  %578 = vrot.lane.b32.xlu0 %v425, 64
  %v579 = vpop.permute.xlu0 %578
  %v585 = vsel %vm225, %v542, %v571
  %v586 = vsel %vm225, %v547, %v573
  %v587 = vsel %vm225, %v552, %v575
  %v588 = vsel %vm225, %v557, %v577
  %v589 = vsel %vm225, %v562, %v579
  %v590 = vlaneseq
  %v591 = vshrl.u32 %v590, 7
  %v592 = vsub.s32 0, %v591
  %v593 = vrot.slane %v439, %v592
  %v595 = vsel %vm235, %v585, 0
  %v598 = vsel %vm235, %v586, 0
  %v601 = vsel %vm235, %v587, 0
  %v604 = vsel %vm235, %v588, 0
  %v607 = vsel %vm235, %v589, 0
  %609 = vmatprep.subr.mxu0 0.0
  %610 = vmatpush1.msra.mxu0 %v427
  %611 = vmatprep.subr.mxu0 0.0
  %612 = vmatpush1.msra.mxu0 %v428
  %613 = vmatprep.subr.mxu0 0.0
  %614 = vmatpush1.msra.mxu0 %v429
  %615 = vmatprep.subr.mxu0 0.0
  %616 = vmatpush1.msra.mxu0 %v430
  %617 = vmatprep.subr.mxu0 0.0
  %618 = vmatpush1.msra.mxu0 %v431
  %619 = vmatprep.subr.mxu0 0.0
  %620 = vmatpush1.msra.mxu0 %v432
  %621 = vmatprep.subr.mxu0 0.0
  %622 = vmatpush1.msra.mxu0 %v433
  %623 = vmatprep.subr.mxu0 0.0
  %624 = vmatpush1.msra.mxu0 %v434
  %625 = vmatprep.subr.mxu0 0.0
  %626 = vmatpush1.msra.mxu0 %v435
  %627 = vmatprep.subr.mxu0 0.0
  %628 = vmatpush1.msra.mxu0 %v436
  %629 = vmatprep.subr.mxu0 0.0
  %630 = vmatpush1.msra.mxu0 %v437
  %631 = vmatprep.subr.mxu0 0.0
  %632 = vmatpush1.msra.mxu0 %v438
  %633 = vmatprep.subr.mxu0 0.0
  %634 = vmatpush1.msra.mxu0 0.0
  %635 = vmatprep.subr.mxu0 0.0
  %636 = vmatpush1.msra.mxu0 0.0
  %637 = vmatprep.subr.mxu0 0.0
  %638 = vmatpush1.msra.mxu0 0.0
  %639 = vmatprep.subr.mxu0 0.0
  %640 = vmatpush1.msra.mxu0 0.0
  %641 = vmatprep.subr.mxu0 0.0
  %642 = vmatpush1.msra.mxu0 0.0
  %643 = vmatprep.subr.mxu0 0.0
  %644 = vmatpush1.msra.mxu0 0.0
  %645 = vmatprep.subr.mxu0 0.0
  %646 = vmatpush1.msra.mxu0 0.0
  %647 = vmatprep.subr.mxu0 0.0
  %648 = vmatpush1.msra.mxu0 0.0
  %649 = vmatprep.subr.mxu0 0.0
  %650 = vmatpush1.msra.mxu0 0.0
  %651 = vmatprep.subr.mxu0 0.0
  %652 = vmatpush1.msra.mxu0 0.0
  %653 = vmatprep.subr.mxu0 0.0
  %654 = vmatpush1.msra.mxu0 0.0
  %655 = vmatprep.subr.mxu0 0.0
  %656 = vmatpush1.msra.mxu0 0.0
  %657 = vmatprep.subr.mxu0 0.0
  %658 = vmatpush1.msra.mxu0 0.0
  %659 = vmatprep.subr.mxu0 0.0
  %660 = vmatpush1.msra.mxu0 0.0
  %661 = vmatprep.subr.mxu0 0.0
  %662 = vmatpush1.msra.mxu0 0.0
  %663 = vmatprep.subr.mxu0 0.0
  %664 = vmatpush1.msra.mxu0 0.0
  %665 = vmatprep.subr.mxu0 0.0
  %666 = vmatpush1.msra.mxu0 0.0
  %667 = vmatprep.subr.mxu0 0.0
  %668 = vmatpush1.msra.mxu0 0.0
  %669 = vmatprep.subr.mxu0 0.0
  %670 = vmatpush1.msra.mxu0 0.0
  %671 = vmatprep.subr.mxu0 0.0
  %672 = vmatpush1.msra.mxu0 0.0
  %673 = vmatprep.mubr.f32.mxu0 0.0
  %674 = vmatmul.mubr.f32.gmra.mrb[0].mxu0 %v595
  %v675 = vpop.f32.mrb[0].mxu0
  %v676 = vadd.f32 %v593, %v675
  %v677 = vpop.f32.mrb[0].mxu0
  %678 = vmatprep.mubr.f32.mxu0 0.0
  %679 = vmatmul.mubr.f32.gmra.mrb[0].mxu0 %v598
  %v680 = vpop.f32.mrb[0].mxu0
  %v681 = vadd.f32 %v593, %v680
  %v682 = vpop.f32.mrb[0].mxu0
  %683 = vmatprep.mubr.f32.mxu0 0.0
  %684 = vmatmul.mubr.f32.gmra.mrb[0].mxu0 %v601
  %v685 = vpop.f32.mrb[0].mxu0
  %v686 = vadd.f32 %v593, %v685
  %v687 = vpop.f32.mrb[0].mxu0
  %688 = vmatprep.mubr.f32.mxu0 0.0
  %689 = vmatmul.mubr.f32.gmra.mrb[0].mxu0 %v604
  %v690 = vpop.f32.mrb[0].mxu0
  %v691 = vadd.f32 %v593, %v690
  %v692 = vpop.f32.mrb[0].mxu0
  %693 = vmatprep.mubr.f32.mxu0 0.0
  %694 = vmatmul.mubr.f32.gmra.mrb[0].mxu0 %v607
  %v695 = vpop.f32.mrb[0].mxu0
  %v696 = vadd.f32 %v593, %v695
  %v697 = vpop.f32.mrb[0].mxu0
  %698 = vdwg.mxu0
  %704 = vrot.lane.b32.xlu0 %v676, 96
  %v705 = vpop.permute.xlu0 %704
  %706 = vrot.lane.b32.xlu0 %v681, 96
  %v707 = vpop.permute.xlu0 %706
  %708 = vrot.lane.b32.xlu0 %v686, 96
  %v709 = vpop.permute.xlu0 %708
  %710 = vrot.lane.b32.xlu0 %v691, 96
  %v711 = vpop.permute.xlu0 %710
  %712 = vrot.lane.b32.xlu0 %v696, 96
  %v713 = vpop.permute.xlu0 %712
  %v719 = vsel %vm341, %v676, %v705
  %v720 = vsel %vm342, %v681, %v707
  %v721 = vsel %vm343, %v686, %v709
  %v722 = vsel %vm344, %v691, %v711
  %v723 = vsel %vm345, %v696, %v713
  %vm724 = vcmp.ge.f32.partialorder %v719, 0.0
  %vm725 = vcmp.ge.f32.partialorder %v720, 0.0
  %vm726 = vcmp.ge.f32.partialorder %v721, 0.0
  %vm727 = vcmp.ge.f32.partialorder %v722, 0.0
  %vm728 = vcmp.ge.f32.partialorder %v723, 0.0
  %v729 = vmul.f32 %v719, 0.01
  %v730 = vmul.f32 %v720, 0.01
  %v731 = vmul.f32 %v721, 0.01
  %v732 = vmul.f32 %v722, 0.01
  %v733 = vmul.f32 %v723, 0.01
  %v734 = vsel %vm724, %v719, %v729
  %v735 = vsel %vm725, %v720, %v730
  %v736 = vsel %vm726, %v721, %v731
  %v737 = vsel %vm727, %v722, %v732
  %v738 = vsel %vm728, %v723, %v733
  %v739 = vadd.f32 %v734, %v421
  %v740 = vadd.f32 %v735, %v422
  %v741 = vadd.f32 %v736, %v423
  %v742 = vadd.f32 %v737, %v424
  %v743 = vadd.f32 %v738, %v425
  %v744 = vmul.f32 %v739, %v739
  %v745 = vmul.f32 %v740, %v740
  %v746 = vmul.f32 %v741, %v741
  %v747 = vmul.f32 %v742, %v742
  %v748 = vmul.f32 %v743, %v743
  %v749 = vsel %vm93, %v744, 0.0
  %750 = vadd.xlane.f32.xlu0 %v749
  %v751 = vpop.xlane.xlu0 %750
  %v752 = vsel %vm93, %v745, 0.0
  %753 = vadd.xlane.f32.xlu0 %v752
  %v754 = vpop.xlane.xlu0 %753
  %v755 = vsel %vm93, %v746, 0.0
  %756 = vadd.xlane.f32.xlu0 %v755
  %v757 = vpop.xlane.xlu0 %756
  %v758 = vsel %vm93, %v747, 0.0
  %759 = vadd.xlane.f32.xlu0 %v758
  %v760 = vpop.xlane.xlu0 %759
  %v761 = vsel %vm93, %v748, 0.0
  %762 = vadd.xlane.f32.xlu0 %v761
  %v763 = vpop.xlane.xlu0 %762
  %v764 = vmax.f32 %v751, 1e-24
  %v765 = vmax.f32 %v754, 1e-24
  %v766 = vmax.f32 %v757, 1e-24
  %v767 = vmax.f32 %v760, 1e-24
  %v768 = vmax.f32 %v763, 1e-24
  %v769 = vrsqrt.pop %v764
  %v770 = vrsqrt.pop %v765
  %v771 = vrsqrt.pop %v766
  %v772 = vrsqrt.pop %v767
  %v773 = vrsqrt.pop %v768
  %v774 = vmul.f32 %v739, %v769
  %v775 = vmul.f32 %v740, %v770
  %v776 = vmul.f32 %v741, %v771
  %v777 = vmul.f32 %v742, %v772
  %v778 = vmul.f32 %v743, %v773
  %v779 = vmax.f32 %v421, %v774
  %v780 = vmax.f32 %v422, %v775
  %v781 = vmax.f32 %v423, %v776
  %v782 = vmax.f32 %v424, %v777
  %v783 = vmax.f32 %v425, %v778
  %784 = vst.msk [vmem:[%s3] sm:$0xff] %vm93, %v779
  %785 = vst.msk [vmem:[%s3 + $0x8] sm:$0xff] %vm93, %v780
  %786 = vst.msk [vmem:[%s3 + $0x10] sm:$0xff] %vm93, %v781
  %787 = vst.msk [vmem:[%s3 + $0x18] sm:$0xff] %vm93, %v782
  %788 = vst.msk [vmem:[%s3 + $0x20] sm:$0xff] %vm93, %v783
  // Predicated region
  $region14: #{tpu_custom_call.1} parent=0 // pred_check
    _
  $region15: #{tpu_custom_call.1} parent=0 // pred_check_branch
    %790 = sbr.rel (0) target = $region17
  $region16: #{tpu_custom_call.1} parent=0 // pred_region
    _
  $region17: #{tpu_custom_call.1} parent=0 // pred_fallthru
    _
  // Predicated region
  $region18: #{tpu_custom_call.1} parent=0 // pred_check
    _
  $region19: #{tpu_custom_call.1} parent=0 // pred_check_branch
    %792 = sbr.rel (0) target = $region21
  $region20: #{tpu_custom_call.1} parent=0 // pred_region
    _
  $region21: #{tpu_custom_call.1} parent=0 // pred_fallthru
    _

</llo_original>
